<compile_context>
chip_gen: v5e
topology: v5e:2x2
jax: 0.10.0
libtpu: 0.0.40
codegen_flags: <defaults>
</compile_context>

<pallas_src>
import functools

import jax
import jax.numpy as jnp
from jax.experimental import pallas as pl
from jax.experimental.pallas import tpu as pltpu


# ----------------------------------------------------------------------------
# Pallas kernel: fused (patches @ W + b) -> LayerNorm(gamma, beta)
# ----------------------------------------------------------------------------
def _patch_embed_kernel(p_ref, w_ref, b_ref, g_ref, beta_ref, o_ref, *,
                        eps, embed_dim):
    """p_ref:    (TM, Kp) bf16 patch rows for this grid step (K zero-padded)
       w_ref:    (Kp, E)  bf16 projection weight (conv weight reshaped)
       b_ref, g_ref, beta_ref: (1, E) f32 conv bias / LN gamma / LN beta
       o_ref:    (TM, E)  normalized embeddings (out dtype)
    """
    # Patch projection on the MXU: bf16 x bf16 -> f32 accumulate.
    y = jnp.dot(p_ref[...], w_ref[...], preferred_element_type=jnp.float32)
    y = y + b_ref[...]

    # One-pass LayerNorm statistics over the embedding (lane) axis.
    inv_e = 1.0 / float(embed_dim)
    s1 = jnp.sum(y, axis=-1, keepdims=True)
    s2 = jnp.sum(y * y, axis=-1, keepdims=True)
    mean = s1 * inv_e
    var = jnp.maximum(s2 * inv_e - mean * mean, 0.0)
    inv = jax.lax.rsqrt(var + eps)            # EUP rsqrt (free slot)

    o_ref[...] = ((y - mean) * inv * g_ref[...] + beta_ref[...]).astype(o_ref.dtype)


# ----------------------------------------------------------------------------
# Wrapper: layout glue + tiled pallas_call
# ----------------------------------------------------------------------------
def _pick_tile_m(m, tile_m):
    """Largest multiple of 8 that divides m and is <= tile_m (None if none)."""
    best = None
    for t in range(8, min(tile_m, m) + 1, 8):
        if m % t == 0:
            best = t
    return best


def patch_embed_forward(x_nchw, params, patch_size, *, eps=1e-5, tile_m=512,
                        out_dtype=jnp.bfloat16):
    """Returns (embeddings of shape (B, Hp*Wp, E), (Hp, Wp))."""
    w = params["proj_w"]      # (E, C, P, P)  -- nn.Conv2d weight layout
    b = params["proj_b"]      # (E,)
    gamma = params["ln_g"]    # (E,)
    beta = params["ln_b"]     # (E,)

    B, C, H, W = x_nchw.shape
    P = patch_size
    assert H % P == 0 and W % P == 0, "img_size must be divisible by patch_size"
    Hp, Wp = H // P, W // P
    E = w.shape[0]
    K = C * P * P
    M = B * Hp * Wp

    # Cast to bf16 BEFORE im2col so the patch matrix (materialized or fused)
    # and its kernel DMA move half the bytes.  (B,C,H,W) ->
    # (B*Hp*Wp, C*P*P), patch rows in the same (b, i*Wp + j) order as
    # proj(x).flatten(2).transpose(1, 2).
    x = x_nchw.astype(jnp.bfloat16)
    patches = x.reshape(B, C, Hp, P, Wp, P)
    patches = patches.transpose(0, 2, 4, 1, 3, 5).reshape(M, K)

    # Pad K (lane dim of the patch tile) up to a multiple of 128 with zeros;
    # zero columns/rows contribute nothing to the matmul.  Never pad E.
    Kp = ((K + 127) // 128) * 128
    if Kp != K:
        patches = jnp.pad(patches, ((0, 0), (0, Kp - K)))

    # Conv weight flattened the same way: (E, C*P*P) -> (Kp, E), bf16.
    w2d = w.reshape(E, K).T.astype(jnp.bfloat16)
    if Kp != K:
        w2d = jnp.pad(w2d, ((0, Kp - K), (0, 0)))
    b2d = b.reshape(1, E).astype(jnp.float32)
    g2d = gamma.reshape(1, E).astype(jnp.float32)
    beta2d = beta.reshape(1, E).astype(jnp.float32)

    # Row tiling: prefer a tile that divides M exactly so neither jnp.pad nor
    # out[:M] costs an extra HBM pass.  Padding is only a fallback.
    if M <= tile_m:
        tm, n_tiles, Mp = M, 1, M           # single full-extent block
    else:
        tm = _pick_tile_m(M, tile_m)
        if tm is None:                      # fallback: pad M up
            tm = max(8, (min(tile_m, M) // 8) * 8)
        n_tiles = pl.cdiv(M, tm)
        Mp = n_tiles * tm
    if Mp != M:
        patches = jnp.pad(patches, ((0, Mp - M), (0, 0)))

    # Per-step VMEM: double-buffered patch & output tiles + resident params
    # (sized for the double-buffered-weight worst case).
    out_itemsize = jnp.dtype(out_dtype).itemsize
    vmem_est = (2 * tm * Kp * 2 + 2 * tm * E * out_itemsize
                + 2 * Kp * E * 2 + 4 * E * 4)
    vmem_limit = int(min(max(2 * vmem_est, 32 * 1024 * 1024),
                         48 * 1024 * 1024))

    kernel = functools.partial(_patch_embed_kernel, eps=eps, embed_dim=E)
    out_shape = jax.ShapeDtypeStruct((Mp, E), out_dtype)
    compiler_params = pltpu.CompilerParams(
        dimension_semantics=("parallel",),        # shards M tiles across TCs
        vmem_limit_bytes=vmem_limit,
        # Let XLA fuse the im2col cast/reshape/transpose/pad into the patch
        # operand instead of materializing the (M, Kp) intermediate in HBM.
        allow_input_fusion=[True, False, False, False, False],
    )

    def build(single_buffer_consts):
        const_kw = (dict(pipeline_mode=pl.Buffered(1))
                    if single_buffer_consts else {})
        grid_spec = pltpu.PrefetchScalarGridSpec(
            num_scalar_prefetch=0,
            grid=(n_tiles,),
            in_specs=[
                pl.BlockSpec((tm, Kp), lambda i: (i, 0)),            # patches
                pl.BlockSpec((Kp, E), lambda i: (0, 0), **const_kw),  # weight
                pl.BlockSpec((1, E), lambda i: (0, 0), **const_kw),   # bias
                pl.BlockSpec((1, E), lambda i: (0, 0), **const_kw),   # gamma
                pl.BlockSpec((1, E), lambda i: (0, 0), **const_kw),   # beta
            ],
            out_specs=pl.BlockSpec((tm, E), lambda i: (i, 0)),
        )
        return pl.pallas_call(kernel, out_shape=out_shape,
                              grid_spec=grid_spec,
                              compiler_params=compiler_params)

    try:
        out = build(True)(patches, w2d, b2d, g2d, beta2d)
    except Exception:
        # pipeline_mode=pl.Buffered(1) not supported on this jax build: keep
        # the default double-buffered constants (costs one extra weight copy).
        out = build(False)(patches, w2d, b2d, g2d, beta2d)

    if Mp != M:
        out = out[:M]
    out = out.reshape(B, Hp * Wp, E)
    return out, (Hp, Wp)


# ----------------------------------------------------------------------------
# Pure-JAX reference (same math, no Pallas) for a correctness check
# ----------------------------------------------------------------------------
def reference_forward(x_nchw, params, patch_size, eps=1e-5):
    w, b = params["proj_w"], params["proj_b"]
    gamma, beta = params["ln_g"], params["ln_b"]
    P = patch_size
    y = jax.lax.conv_general_dilated(
        x_nchw.astype(jnp.float32), w.astype(jnp.float32),
        window_strides=(P, P), padding="VALID",
        dimension_numbers=("NCHW", "OIHW", "NCHW"))
    y = y + b[None, :, None, None]
    B, E, Hp, Wp = y.shape
    y = y.reshape(B, E, Hp * Wp).transpose(0, 2, 1)        # (B, N, E)
    mean = y.mean(-1, keepdims=True)
    var = ((y - mean) ** 2).mean(-1, keepdims=True)
    y = (y - mean) / jnp.sqrt(var + eps) * gamma + beta
    return y, (Hp, Wp)


# ----------------------------------------------------------------------------
if __name__ == "__main__":
    key = jax.random.PRNGKey(0)
    kx, kw, kb, kg, kbt = jax.random.split(key, 5)

    # Small shapes consistent with the module: 32x32 image, 8x8 patches,
    # 3 input channels, embed_dim=128 (lane-dense output; K=192 -> padded 256).
    B, C, H, W = 2, 3, 32, 32
    P, E = 8, 128

    x = jax.random.normal(kx, (B, C, H, W), jnp.float32)
    params = dict(
        proj_w=0.1 * jax.random.normal(kw, (E, C, P, P), jnp.float32),
        proj_b=0.1 * jax.random.normal(kb, (E,), jnp.float32),
        ln_g=1.0 + 0.1 * jax.random.normal(kg, (E,), jnp.float32),
        ln_b=0.1 * jax.random.normal(kbt, (E,), jnp.float32),
    )

    out, (hp, wp) = patch_embed_forward(x, params, P)
    out = jax.block_until_ready(out)

    ref, (hp_r, wp_r) = reference_forward(x, params, P)
    ref = jax.block_until_ready(ref)

    assert (hp, wp) == (H // P, W // P) == (hp_r, wp_r)
    assert out.shape == (B, hp * wp, E), out.shape
    err = float(jnp.max(jnp.abs(out.astype(jnp.float32) - ref)))
    # bf16 matmul operands + bf16 output: quantization error ~1e-2 scale.
    assert err < 5e-2, f"max abs err too large: {err}"

    print("KERNEL_OK")
</pallas_src>

<mosaic_0001>
module attributes {stable_mosaic.version = 11 : i64} {
  func.func @_patch_embed_kernel(%arg0: i32, %arg1: memref<32x256xbf16, #tpu.memory_space<vmem>>, %arg2: memref<256x128xbf16, #tpu.memory_space<vmem>>, %arg3: memref<1x128xf32, #tpu.memory_space<vmem>>, %arg4: memref<1x128xf32, #tpu.memory_space<vmem>>, %arg5: memref<1x128xf32, #tpu.memory_space<vmem>>, %arg6: memref<32x128xbf16, #tpu.memory_space<vmem>>) attributes {dimension_semantics = [#tpu.dimension_semantics<parallel>], iteration_bounds = array<i64: 1>, scalar_prefetch = 0 : i64, scratch_operands = 0 : i64, tpu.core_type = #tpu.core_type<tc>, window_params = [{transform_indices = @transform_0, window_bounds = array<i64: 32, 256>}, {pipeline_mode = #tpu.pipeline_mode<synchronous>, transform_indices = @transform_1, window_bounds = array<i64: 256, 128>}, {pipeline_mode = #tpu.pipeline_mode<synchronous>, transform_indices = @transform_2, window_bounds = array<i64: 1, 128>}, {pipeline_mode = #tpu.pipeline_mode<synchronous>, transform_indices = @transform_3, window_bounds = array<i64: 1, 128>}, {pipeline_mode = #tpu.pipeline_mode<synchronous>, transform_indices = @transform_4, window_bounds = array<i64: 1, 128>}, {transform_indices = @transform_5, window_bounds = array<i64: 32, 128>}]} {
    %c0 = arith.constant 0 : index
    %c0_0 = arith.constant 0 : index
    %0 = vector.load %arg1[%c0, %c0_0] : memref<32x256xbf16, #tpu.memory_space<vmem>>, vector<32x256xbf16>
    %c0_1 = arith.constant 0 : index
    %c0_2 = arith.constant 0 : index
    %1 = vector.load %arg2[%c0_1, %c0_2] : memref<256x128xbf16, #tpu.memory_space<vmem>>, vector<256x128xbf16>
    %cst = arith.constant dense<0.000000e+00> : vector<32x128xf32>
    %2 = tpu.matmul %0, %1, %cst {dimension_numbers = #tpu.dot_dimension_numbers<[1], [0], [0], [1], [0, 0, 1, 1], [], []>} : vector<32x256xbf16>, vector<256x128xbf16>, vector<32x128xf32> -> vector<32x128xf32>
    %c0_3 = arith.constant 0 : index
    %c0_4 = arith.constant 0 : index
    %3 = vector.load %arg3[%c0_3, %c0_4] : memref<1x128xf32, #tpu.memory_space<vmem>>, vector<1x128xf32>
    %4 = vector.broadcast %3 : vector<1x128xf32> to vector<32x128xf32>
    %5 = arith.addf %2, %4 : vector<32x128xf32>
    %cst_5 = arith.constant dense<0.000000e+00> : vector<32xf32>
    %6 = vector.multi_reduction <add>, %5, %cst_5 [1] : vector<32x128xf32> to vector<32xf32>
    %7 = vector.shape_cast %6 : vector<32xf32> to vector<32x1xf32>
    %8 = arith.mulf %5, %5 : vector<32x128xf32>
    %cst_6 = arith.constant dense<0.000000e+00> : vector<32xf32>
    %9 = vector.multi_reduction <add>, %8, %cst_6 [1] : vector<32x128xf32> to vector<32xf32>
    %10 = vector.shape_cast %9 : vector<32xf32> to vector<32x1xf32>
    %cst_7 = arith.constant 7.812500e-03 : f32
    %11 = vector.broadcast %cst_7 : f32 to vector<32x1xf32>
    %12 = arith.mulf %7, %11 : vector<32x1xf32>
    %cst_8 = arith.constant 7.812500e-03 : f32
    %13 = vector.broadcast %cst_8 : f32 to vector<32x1xf32>
    %14 = arith.mulf %10, %13 : vector<32x1xf32>
    %15 = arith.mulf %12, %12 : vector<32x1xf32>
    %16 = arith.subf %14, %15 : vector<32x1xf32>
    %cst_9 = arith.constant 0.000000e+00 : f32
    %17 = vector.broadcast %cst_9 : f32 to vector<32x1xf32>
    %18 = arith.maximumf %16, %17 : vector<32x1xf32>
    %cst_10 = arith.constant 9.99999974E-6 : f32
    %19 = vector.broadcast %cst_10 : f32 to vector<32x1xf32>
    %20 = arith.addf %18, %19 : vector<32x1xf32>
    %21 = math.rsqrt %20 : vector<32x1xf32>
    %22 = vector.broadcast %12 : vector<32x1xf32> to vector<32x128xf32>
    %23 = arith.subf %5, %22 : vector<32x128xf32>
    %24 = vector.broadcast %21 : vector<32x1xf32> to vector<32x128xf32>
    %25 = arith.mulf %23, %24 : vector<32x128xf32>
    %c0_11 = arith.constant 0 : index
    %c0_12 = arith.constant 0 : index
    %26 = vector.load %arg4[%c0_11, %c0_12] : memref<1x128xf32, #tpu.memory_space<vmem>>, vector<1x128xf32>
    %27 = vector.broadcast %26 : vector<1x128xf32> to vector<32x128xf32>
    %28 = arith.mulf %25, %27 : vector<32x128xf32>
    %c0_13 = arith.constant 0 : index
    %c0_14 = arith.constant 0 : index
    %29 = vector.load %arg5[%c0_13, %c0_14] : memref<1x128xf32, #tpu.memory_space<vmem>>, vector<1x128xf32>
    %30 = vector.broadcast %29 : vector<1x128xf32> to vector<32x128xf32>
    %31 = arith.addf %28, %30 : vector<32x128xf32>
    %32 = arith.truncf %31 : vector<32x128xf32> to vector<32x128xbf16>
    %c0_15 = arith.constant 0 : index
    %c0_16 = arith.constant 0 : index
    %33 = vector.load %arg6[%c0_15, %c0_16] : memref<32x128xbf16, #tpu.memory_space<vmem>>, vector<32x128xbf16>
    tpu.vector_store %arg6[%c0_15, %c0_16], %32 {strides = array<i32>} : memref<32x128xbf16, #tpu.memory_space<vmem>>, vector<32x128xbf16>,
    return
  }
  func.func @transform_0(%arg0: i32) -> (i32, i32) {
    %c0_i32 = arith.constant 0 : i32
    %c0_i32_0 = arith.constant 0 : i32
    return %arg0, %c0_i32 : i32, i32
  }
  func.func @transform_1(%arg0: i32) -> (i32, i32) {
    %c0_i32 = arith.constant 0 : i32
    %c0_i32_0 = arith.constant 0 : i32
    %c0_i32_1 = arith.constant 0 : i32
    return %c0_i32, %c0_i32_0 : i32, i32
  }
  func.func @transform_2(%arg0: i32) -> (i32, i32) {
    %c0_i32 = arith.constant 0 : i32
    %c0_i32_0 = arith.constant 0 : i32
    %c0_i32_1 = arith.constant 0 : i32
    return %c0_i32, %c0_i32_0 : i32, i32
  }
  func.func @transform_3(%arg0: i32) -> (i32, i32) {
    %c0_i32 = arith.constant 0 : i32
    %c0_i32_0 = arith.constant 0 : i32
    %c0_i32_1 = arith.constant 0 : i32
    return %c0_i32, %c0_i32_0 : i32, i32
  }
  func.func @transform_4(%arg0: i32) -> (i32, i32) {
    %c0_i32 = arith.constant 0 : i32
    %c0_i32_0 = arith.constant 0 : i32
    %c0_i32_1 = arith.constant 0 : i32
    return %c0_i32, %c0_i32_0 : i32, i32
  }
  func.func @transform_5(%arg0: i32) -> (i32, i32) {
    %c0_i32 = arith.constant 0 : i32
    %c0_i32_0 = arith.constant 0 : i32
    return %arg0, %c0_i32 : i32, i32
  }
}

module attributes {stable_mosaic.version = 11 : i64} {
  func.func @_patch_embed_kernel(%arg0: i32, %arg1: memref<32x256xbf16, #tpu.memory_space<vmem>>, %arg2: memref<256x128xbf16, #tpu.memory_space<vmem>>, %arg3: memref<1x128xf32, #tpu.memory_space<vmem>>, %arg4: memref<1x128xf32, #tpu.memory_space<vmem>>, %arg5: memref<1x128xf32, #tpu.memory_space<vmem>>, %arg6: memref<32x128xbf16, #tpu.memory_space<vmem>>) attributes {dimension_semantics = [#tpu.dimension_semantics<parallel>], iteration_bounds = array<i64: 1>, scalar_prefetch = 0 : i64, scratch_operands = 0 : i64, tpu.core_type = #tpu.core_type<tc>, window_params = [{transform_indices = @transform_0, window_bounds = array<i64: 32, 256>}, {pipeline_mode = #tpu.pipeline_mode<synchronous>, transform_indices = @transform_1, window_bounds = array<i64: 256, 128>}, {pipeline_mode = #tpu.pipeline_mode<synchronous>, transform_indices = @transform_2, window_bounds = array<i64: 1, 128>}, {pipeline_mode = #tpu.pipeline_mode<synchronous>, transform_indices = @transform_3, window_bounds = array<i64: 1, 128>}, {pipeline_mode = #tpu.pipeline_mode<synchronous>, transform_indices = @transform_4, window_bounds = array<i64: 1, 128>}, {transform_indices = @transform_5, window_bounds = array<i64: 32, 128>}]} {
    %c0 = arith.constant 0 : index
    %c0_0 = arith.constant 0 : index
    %0 = vector.load %arg1[%c0, %c0_0] : memref<32x256xbf16, #tpu.memory_space<vmem>>, vector<32x256xbf16>
    %c0_1 = arith.constant 0 : index
    %c0_2 = arith.constant 0 : index
    %1 = vector.load %arg2[%c0_1, %c0_2] : memref<256x128xbf16, #tpu.memory_space<vmem>>, vector<256x128xbf16>
    %cst = arith.constant dense<0.000000e+00> : vector<32x128xf32>
    %2 = tpu.matmul %0, %1, %cst {dimension_numbers = #tpu.dot_dimension_numbers<[1], [0], [0], [1], [0, 0, 1, 1], [], []>} : vector<32x256xbf16>, vector<256x128xbf16>, vector<32x128xf32> -> vector<32x128xf32>
    %c0_3 = arith.constant 0 : index
    %c0_4 = arith.constant 0 : index
    %3 = vector.load %arg3[%c0_3, %c0_4] : memref<1x128xf32, #tpu.memory_space<vmem>>, vector<1x128xf32>
    %4 = vector.broadcast %3 : vector<1x128xf32> to vector<32x128xf32>
    %5 = arith.addf %2, %4 : vector<32x128xf32>
    %cst_5 = arith.constant dense<0.000000e+00> : vector<32xf32>
    %6 = vector.multi_reduction <add>, %5, %cst_5 [1] : vector<32x128xf32> to vector<32xf32>
    %7 = vector.shape_cast %6 : vector<32xf32> to vector<32x1xf32>
    %8 = arith.mulf %5, %5 : vector<32x128xf32>
    %cst_6 = arith.constant dense<0.000000e+00> : vector<32xf32>
    %9 = vector.multi_reduction <add>, %8, %cst_6 [1] : vector<32x128xf32> to vector<32xf32>
    %10 = vector.shape_cast %9 : vector<32xf32> to vector<32x1xf32>
    %cst_7 = arith.constant 7.812500e-03 : f32
    %11 = vector.broadcast %cst_7 : f32 to vector<32x1xf32>
    %12 = arith.mulf %7, %11 : vector<32x1xf32>
    %cst_8 = arith.constant 7.812500e-03 : f32
    %13 = vector.broadcast %cst_8 : f32 to vector<32x1xf32>
    %14 = arith.mulf %10, %13 : vector<32x1xf32>
    %15 = arith.mulf %12, %12 : vector<32x1xf32>
    %16 = arith.subf %14, %15 : vector<32x1xf32>
    %cst_9 = arith.constant 0.000000e+00 : f32
    %17 = vector.broadcast %cst_9 : f32 to vector<32x1xf32>
    %18 = arith.maximumf %16, %17 : vector<32x1xf32>
    %cst_10 = arith.constant 9.99999974E-6 : f32
    %19 = vector.broadcast %cst_10 : f32 to vector<32x1xf32>
    %20 = arith.addf %18, %19 : vector<32x1xf32>
    %21 = math.rsqrt %20 : vector<32x1xf32>
    %22 = vector.broadcast %12 : vector<32x1xf32> to vector<32x128xf32>
    %23 = arith.subf %5, %22 : vector<32x128xf32>
    %24 = vector.broadcast %21 : vector<32x1xf32> to vector<32x128xf32>
    %25 = arith.mulf %23, %24 : vector<32x128xf32>
    %c0_11 = arith.constant 0 : index
    %c0_12 = arith.constant 0 : index
    %26 = vector.load %arg4[%c0_11, %c0_12] : memref<1x128xf32, #tpu.memory_space<vmem>>, vector<1x128xf32>
    %27 = vector.broadcast %26 : vector<1x128xf32> to vector<32x128xf32>
    %28 = arith.mulf %25, %27 : vector<32x128xf32>
    %c0_13 = arith.constant 0 : index
    %c0_14 = arith.constant 0 : index
    %29 = vector.load %arg5[%c0_13, %c0_14] : memref<1x128xf32, #tpu.memory_space<vmem>>, vector<1x128xf32>
    %30 = vector.broadcast %29 : vector<1x128xf32> to vector<32x128xf32>
    %31 = arith.addf %28, %30 : vector<32x128xf32>
    %32 = arith.truncf %31 : vector<32x128xf32> to vector<32x128xbf16>
    %c0_15 = arith.constant 0 : index
    %c0_16 = arith.constant 0 : index
    %33 = vector.load %arg6[%c0_15, %c0_16] : memref<32x128xbf16, #tpu.memory_space<vmem>>, vector<32x128xbf16>
    tpu.vector_store %arg6[%c0_15, %c0_16], %32 {strides = array<i32>} : memref<32x128xbf16, #tpu.memory_space<vmem>>, vector<32x128xbf16>,
    return
  }
  func.func @transform_0(%arg0: i32) -> (i32, i32) {
    %c0_i32 = arith.constant 0 : i32
    %c0_i32_0 = arith.constant 0 : i32
    return %arg0, %c0_i32 : i32, i32
  }
  func.func @transform_1(%arg0: i32) -> (i32, i32) {
    %c0_i32 = arith.constant 0 : i32
    %c0_i32_0 = arith.constant 0 : i32
    %c0_i32_1 = arith.constant 0 : i32
    return %c0_i32, %c0_i32_0 : i32, i32
  }
  func.func @transform_2(%arg0: i32) -> (i32, i32) {
    %c0_i32 = arith.constant 0 : i32
    %c0_i32_0 = arith.constant 0 : i32
    %c0_i32_1 = arith.constant 0 : i32
    return %c0_i32, %c0_i32_0 : i32, i32
  }
  func.func @transform_3(%arg0: i32) -> (i32, i32) {
    %c0_i32 = arith.constant 0 : i32
    %c0_i32_0 = arith.constant 0 : i32
    %c0_i32_1 = arith.constant 0 : i32
    return %c0_i32, %c0_i32_0 : i32, i32
  }
  func.func @transform_4(%arg0: i32) -> (i32, i32) {
    %c0_i32 = arith.constant 0 : i32
    %c0_i32_0 = arith.constant 0 : i32
    %c0_i32_1 = arith.constant 0 : i32
    return %c0_i32, %c0_i32_0 : i32, i32
  }
  func.func @transform_5(%arg0: i32) -> (i32, i32) {
    %c0_i32 = arith.constant 0 : i32
    %c0_i32_0 = arith.constant 0 : i32
    return %arg0, %c0_i32 : i32, i32
  }
}

</mosaic_0001>

<llo_original>
// kernel: tpu_custom_call.1
$region0: #{tpu_custom_call.1}
  #allocation0 [shape = 'u32[]', space=smem, size = 0x4, offset = 0x4, fixed_abs, tag = 'smem constant byte address 0x4 - core index']
  #allocation1 [shape = 'u32[72,128]{1,0:T(1,128)}', space=vmem, size = 0x9000, scoped, tag = 'internal scratch']
  %s0 = inlined_call_operand.hbm [shape: bf16[32,256], index: 0, kind: input, shape index: {}]
  %s1 = inlined_call_operand.hbm [shape: bf16[256,128], index: 1, kind: input, shape index: {}]
  %s2 = inlined_call_operand.vmem [shape: f32[1,128], index: 2, kind: input, shape index: {}]
  %s3 = inlined_call_operand.vmem [shape: f32[1,128], index: 3, kind: input, shape index: {}]
  %s4 = inlined_call_operand.vmem [shape: f32[1,128], index: 4, kind: input, shape index: {}]
  %s5 = inlined_call_operand.hbm [shape: bf16[32,128], index: 5, kind: output, shape index: {}]
  %s6 = sld [smem:[#allocation0]]
  $region38: #{tpu_custom_call.1} parent=0
    _
  %s8 = ssub.s32 1, %s6
  %s9 = scalar_select 0, %s8, %s6
  $region1: #{tpu_custom_call.1} parent=0
    #allocation2 [shape = 'u8[16384]{0}', space=vmem, size = 0x4000, scoped, tag = 'input window, operand 0, single buffered']
    #allocation3 [shape = 's32[1]{0}', space=sflag, size = 0x4, scoped, tag = 'scoped memory for tpu_custom_call.1']
    #allocation4 [shape = 's32[1]{0}', space=sflag, size = 0x4, scoped, tag = 'scoped memory for tpu_custom_call.1']
    #allocation5 [shape = 'u8[65536]{0}', space=vmem, size = 0x10000, scoped, tag = 'input window, operand 1, single buffered']
    #allocation6 [shape = 's32[1]{0}', space=sflag, size = 0x4, scoped, tag = 'scoped memory for tpu_custom_call.1']
    #allocation7 [shape = 'u8[8192]{0}', space=vmem, size = 0x2000, scoped, tag = 'output window, operand 0, single buffered']
    %10 = vsyncpa [#allocation3], 0
    %11 = vsyncpa [#allocation6], 0
    %12 = vsyncpa [#allocation4], 0
    // Predicated region
    $region2: #{tpu_custom_call.1} parent=1 // pred_check
      _
    $region3: #{tpu_custom_call.1} parent=1 // pred_check_branch
      %14 = sbr.rel (0) target = $region5
    $region4: #{tpu_custom_call.1} parent=1 // pred_region
      %16 = vsyncadd [#allocation3], 0
      %s17 = sshll.u32 %s0, 4
      %s18 = int_to_ptr.hbm [resolvable:$true] %s17
      %s19 = sshll.u32 [#allocation2], 4
      %s20 = int_to_ptr.vmem [resolvable:$true] %s19
      %25 = dma.hbm_to_vmem [thread:$0]  %s18, 512, %s20, [#allocation3], 128, 128, 8
    $region5: #{tpu_custom_call.1} parent=1 // pred_fallthru
      _
    // Predicated region
    $region6: #{tpu_custom_call.1} parent=1 // pred_check
      _
    $region7: #{tpu_custom_call.1} parent=1 // pred_check_branch
      %27 = sbr.rel (0) target = $region9
    $region8: #{tpu_custom_call.1} parent=1 // pred_region
      %29 = vsyncadd [#allocation6], 0
      %s30 = sshll.u32 %s1, 4
      %s31 = int_to_ptr.hbm [resolvable:$true] %s30
      %s32 = sshll.u32 [#allocation5], 4
      %s33 = int_to_ptr.vmem [resolvable:$true] %s32
      %38 = dma.hbm_to_vmem [thread:$0]  %s31, 2048, %s33, [#allocation6], 64, 64, 4
    $region9: #{tpu_custom_call.1} parent=1 // pred_fallthru
      _
    // Predicated region
    $region10: #{tpu_custom_call.1} parent=1 // pred_check
      _
    $region11: #{tpu_custom_call.1} parent=1 // pred_check_branch
      %40 = sbr.rel (0) target = $region13
    $region12: #{tpu_custom_call.1} parent=1 // pred_region
      _
    $region13: #{tpu_custom_call.1} parent=1 // pred_fallthru
      _
    // Predicated region
    $region14: #{tpu_custom_call.1} parent=1 // pred_check
      _
    $region15: #{tpu_custom_call.1} parent=1 // pred_check_branch
      %42 = sbr.rel (0) target = $region17
    $region16: #{tpu_custom_call.1} parent=1 // pred_region
      _
    $region17: #{tpu_custom_call.1} parent=1 // pred_fallthru
      _
    // Predicated region
    $region18: #{tpu_custom_call.1} parent=1 // pred_check
      _
    $region19: #{tpu_custom_call.1} parent=1 // pred_check_branch
      %44 = sbr.rel (0) target = $region21
    $region20: #{tpu_custom_call.1} parent=1 // pred_region
      _
    $region21: #{tpu_custom_call.1} parent=1 // pred_fallthru
      _
    // Predicated region
    $region22: #{tpu_custom_call.1} parent=1 // pred_check
      _
    $region23: #{tpu_custom_call.1} parent=1 // pred_check_branch
      %46 = sbr.rel (0) target = $region25
    $region24: #{tpu_custom_call.1} parent=1 // pred_region
      %48 = dma.done [#allocation3], 512
    $region25: #{tpu_custom_call.1} parent=1 // pred_fallthru
      _
    // Predicated region
    $region26: #{tpu_custom_call.1} parent=1 // pred_check
      _
    $region27: #{tpu_custom_call.1} parent=1 // pred_check_branch
      %50 = sbr.rel (0) target = $region29
    $region28: #{tpu_custom_call.1} parent=1 // pred_region
      %52 = dma.done [#allocation6], 2048
    $region29: #{tpu_custom_call.1} parent=1 // pred_fallthru
      _
    %v53 = vld [vmem:[#allocation2] sm:$0xff]
    %v54 = vld [vmem:[#allocation2 + $0x8] sm:$0xff]
    %v55 = vld [vmem:[#allocation2 + $0x10] sm:$0xff]
    %v56 = vld [vmem:[#allocation2 + $0x18] sm:$0xff]
    %v57 = vld [vmem:[#allocation5] sm:$0xf]
    %v58 = vld [vmem:[#allocation5 + $0x4] sm:$0xf]
    %v59 = vld [vmem:[#allocation5 + $0x8] sm:$0xf]
    %v60 = vld [vmem:[#allocation5 + $0xc] sm:$0xf]
    %v61 = vld [vmem:[#allocation5 + $0x10] sm:$0xf]
    %v62 = vld [vmem:[#allocation5 + $0x14] sm:$0xf]
    %v63 = vld [vmem:[#allocation5 + $0x18] sm:$0xf]
    %v64 = vld [vmem:[#allocation5 + $0x1c] sm:$0xf]
    %v65 = vld [vmem:[#allocation5 + $0x20] sm:$0xf]
    %v66 = vld [vmem:[#allocation5 + $0x24] sm:$0xf]
    %v67 = vld [vmem:[#allocation5 + $0x28] sm:$0xf]
    %v68 = vld [vmem:[#allocation5 + $0x2c] sm:$0xf]
    %v69 = vld [vmem:[#allocation5 + $0x30] sm:$0xf]
    %v70 = vld [vmem:[#allocation5 + $0x34] sm:$0xf]
    %v71 = vld [vmem:[#allocation5 + $0x38] sm:$0xf]
    %v72 = vld [vmem:[#allocation5 + $0x3c] sm:$0xf]
    %v73 = vld [vmem:[#allocation5 + $0x40] sm:$0xf]
    %v74 = vld [vmem:[#allocation5 + $0x44] sm:$0xf]
    %v75 = vld [vmem:[#allocation5 + $0x48] sm:$0xf]
    %v76 = vld [vmem:[#allocation5 + $0x4c] sm:$0xf]
    %v77 = vld [vmem:[#allocation5 + $0x50] sm:$0xf]
    %v78 = vld [vmem:[#allocation5 + $0x54] sm:$0xf]
    %v79 = vld [vmem:[#allocation5 + $0x58] sm:$0xf]
    %v80 = vld [vmem:[#allocation5 + $0x5c] sm:$0xf]
    %v81 = vld [vmem:[#allocation5 + $0x60] sm:$0xf]
    %v82 = vld [vmem:[#allocation5 + $0x64] sm:$0xf]
    %v83 = vld [vmem:[#allocation5 + $0x68] sm:$0xf]
    %v84 = vld [vmem:[#allocation5 + $0x6c] sm:$0xf]
    %v85 = vld [vmem:[#allocation5 + $0x70] sm:$0xf]
    %v86 = vld [vmem:[#allocation5 + $0x74] sm:$0xf]
    %v87 = vld [vmem:[#allocation5 + $0x78] sm:$0xf]
    %v88 = vld [vmem:[#allocation5 + $0x7c] sm:$0xf]
    %v89 = vld [vmem:[%s2] sm:$0x1]
    %v91 = vperm.slane %v89, 0
    %v97 = vunpack.c.l.b16 %v53
    %v98 = vunpack.c.h.b16 %v53
    %v99 = vunpack.c.l.b16 %v54
    %v100 = vunpack.c.h.b16 %v54
    %v101 = vunpack.c.l.b16 %v55
    %v102 = vunpack.c.h.b16 %v55
    %v103 = vunpack.c.l.b16 %v56
    %v104 = vunpack.c.h.b16 %v56
    %v105 = vpack.c.b16 %v99, %v97
    %v106 = vpack.c.b16 %v100, %v98
    %v107 = vpack.c.b16 %v103, %v101
    %v108 = vpack.c.b16 %v104, %v102
    %v145 = vunpack.c.l.b16 %v57
    %v146 = vunpack.c.l.b16 %v58
    %v147 = vunpack.c.l.b16 %v59
    %v148 = vunpack.c.l.b16 %v60
    %v149 = vunpack.c.l.b16 %v61
    %v150 = vunpack.c.l.b16 %v62
    %v151 = vunpack.c.l.b16 %v63
    %v152 = vunpack.c.l.b16 %v64
    %v153 = vunpack.c.l.b16 %v65
    %v154 = vunpack.c.l.b16 %v66
    %v155 = vunpack.c.l.b16 %v67
    %v156 = vunpack.c.l.b16 %v68
    %v157 = vunpack.c.l.b16 %v69
    %v158 = vunpack.c.l.b16 %v70
    %v159 = vunpack.c.l.b16 %v71
    %v160 = vunpack.c.l.b16 %v72
    %v161 = vunpack.c.l.b16 %v73
    %v162 = vunpack.c.l.b16 %v74
    %v163 = vunpack.c.l.b16 %v75
    %v164 = vunpack.c.l.b16 %v76
    %v165 = vunpack.c.l.b16 %v77
    %v166 = vunpack.c.l.b16 %v78
    %v167 = vunpack.c.l.b16 %v79
    %v168 = vunpack.c.l.b16 %v80
    %v169 = vunpack.c.l.b16 %v81
    %v170 = vunpack.c.l.b16 %v82
    %v171 = vunpack.c.l.b16 %v83
    %v172 = vunpack.c.l.b16 %v84
    %v173 = vunpack.c.l.b16 %v85
    %v174 = vunpack.c.l.b16 %v86
    %v175 = vunpack.c.l.b16 %v87
    %v176 = vunpack.c.l.b16 %v88
    %v177 = vpack.c.b16 %v146, %v145
    %v178 = vpack.c.b16 %v148, %v147
    %v179 = vpack.c.b16 %v150, %v149
    %v180 = vpack.c.b16 %v152, %v151
    %v181 = vpack.c.b16 %v154, %v153
    %v182 = vpack.c.b16 %v156, %v155
    %v183 = vpack.c.b16 %v158, %v157
    %v184 = vpack.c.b16 %v160, %v159
    %v185 = vpack.c.b16 %v162, %v161
    %v186 = vpack.c.b16 %v164, %v163
    %v187 = vpack.c.b16 %v166, %v165
    %v188 = vpack.c.b16 %v168, %v167
    %v189 = vpack.c.b16 %v170, %v169
    %v190 = vpack.c.b16 %v172, %v171
    %v191 = vpack.c.b16 %v174, %v173
    %v192 = vpack.c.b16 %v176, %v175
    %209 = vmatpush.bf16.msra.mxu0 %v184
    %210 = vmatpush.bf16.msra.mxu0 %v183
    %211 = vmatpush.bf16.msra.mxu0 %v182
    %212 = vmatpush.bf16.msra.mxu0 %v181
    %213 = vmatpush.bf16.msra.mxu0 %v180
    %214 = vmatpush.bf16.msra.mxu0 %v179
    %215 = vmatpush.bf16.msra.mxu0 %v178
    %216 = vmatpush.bf16.msra.mxu0 %v177
    %217 = vmatmul.bf16.gmra.mxu0 %v105
    %v218 = vpop.f32.mrf.mxu0
    %v219 = vadd.f32 %v91, %v218
    %v220 = vpop.f32.mrf.mxu0
    %v221 = vadd.f32 %v91, %v220
    %222 = vmatmul.bf16.gmra.mxu0 %v107
    %v223 = vpop.f32.mrf.mxu0
    %v224 = vadd.f32 %v91, %v223
    %v225 = vpop.f32.mrf.mxu0
    %v226 = vadd.f32 %v91, %v225
    %227 = vdwg.mxu0
    %228 = vmatpush.bf16.msra.mxu0 %v192
    %229 = vmatpush.bf16.msra.mxu0 %v191
    %230 = vmatpush.bf16.msra.mxu0 %v190
    %231 = vmatpush.bf16.msra.mxu0 %v189
    %232 = vmatpush.bf16.msra.mxu0 %v188
    %233 = vmatpush.bf16.msra.mxu0 %v187
    %234 = vmatpush.bf16.msra.mxu0 %v186
    %235 = vmatpush.bf16.msra.mxu0 %v185
    %236 = vmatmul.bf16.gmra.mxu0 %v106
    %v237 = vpop.f32.mrf.mxu0
    %v238 = vadd.f32 %v219, %v237
    %v239 = vpop.f32.mrf.mxu0
    %v240 = vadd.f32 %v221, %v239
    %241 = vmatmul.bf16.gmra.mxu0 %v108
    %v242 = vpop.f32.mrf.mxu0
    %v243 = vadd.f32 %v224, %v242
    %v244 = vpop.f32.mrf.mxu0
    %v245 = vadd.f32 %v226, %v244
    %246 = vdwg.mxu0
    %247 = vadd.xlane.f32.xlu0 %v238
    %v248 = vpop.xlane.xlu0 %247
    %249 = vadd.xlane.f32.xlu0 %v240
    %v250 = vpop.xlane.xlu0 %249
    %251 = vadd.xlane.f32.xlu0 %v243
    %v252 = vpop.xlane.xlu0 %251
    %253 = vadd.xlane.f32.xlu0 %v245
    %v254 = vpop.xlane.xlu0 %253
    %v255 = vmul.f32 %v238, %v238
    %v256 = vmul.f32 %v240, %v240
    %v257 = vmul.f32 %v243, %v243
    %v258 = vmul.f32 %v245, %v245
    %259 = vadd.xlane.f32.xlu0 %v255
    %v260 = vpop.xlane.xlu0 %259
    %261 = vadd.xlane.f32.xlu0 %v256
    %v262 = vpop.xlane.xlu0 %261
    %263 = vadd.xlane.f32.xlu0 %v257
    %v264 = vpop.xlane.xlu0 %263
    %265 = vadd.xlane.f32.xlu0 %v258
    %v266 = vpop.xlane.xlu0 %265
    %v267 = vmul.f32 %v248, 0.0078125
    %v268 = vmul.f32 %v250, 0.0078125
    %v269 = vmul.f32 %v252, 0.0078125
    %v270 = vmul.f32 %v254, 0.0078125
    %v271 = vmul.f32 %v260, 0.0078125
    %v272 = vmul.f32 %v262, 0.0078125
    %v273 = vmul.f32 %v264, 0.0078125
    %v274 = vmul.f32 %v266, 0.0078125
    %v275 = vmul.f32 %v267, %v267
    %v276 = vmul.f32 %v268, %v268
    %v277 = vmul.f32 %v269, %v269
    %v278 = vmul.f32 %v270, %v270
    %v279 = vsub.f32 %v271, %v275
    %v280 = vsub.f32 %v272, %v276
    %v281 = vsub.f32 %v273, %v277
    %v282 = vsub.f32 %v274, %v278
    %v283 = vmax.f32 %v279, 0.0
    %v284 = vmax.f32 %v280, 0.0
    %v285 = vmax.f32 %v281, 0.0
    %v286 = vmax.f32 %v282, 0.0
    %v287 = vadd.f32 %v283, 1e-05
    %v288 = vadd.f32 %v284, 1e-05
    %v289 = vadd.f32 %v285, 1e-05
    %v290 = vadd.f32 %v286, 1e-05
    %v291 = vrsqrt.pop %v287
    %v292 = vmul.f32 %v291, %v287
    %v293 = vmul.f32 %v292, %v291
    %v294 = vmul.f32 0.5, %v293
    %v295 = vsub.f32 1.5, %v294
    %v296 = vmul.f32 %v291, %v295
    %vm297 = vweird.f32 %v287
    %vm298 = vweird.f32 %v291
    %vm299 = vmor %vm297, %vm298
    %v300 = vsel %vm299, %v291, %v296
    %v301 = vrsqrt.pop %v288
    %v302 = vmul.f32 %v301, %v288
    %v303 = vmul.f32 %v302, %v301
    %v304 = vmul.f32 0.5, %v303
    %v305 = vsub.f32 1.5, %v304
    %v306 = vmul.f32 %v301, %v305
    %vm307 = vweird.f32 %v288
    %vm308 = vweird.f32 %v301
    %vm309 = vmor %vm307, %vm308
    %v310 = vsel %vm309, %v301, %v306
    %v311 = vrsqrt.pop %v289
    %v312 = vmul.f32 %v311, %v289
    %v313 = vmul.f32 %v312, %v311
    %v314 = vmul.f32 0.5, %v313
    %v315 = vsub.f32 1.5, %v314
    %v316 = vmul.f32 %v311, %v315
    %vm317 = vweird.f32 %v289
    %vm318 = vweird.f32 %v311
    %vm319 = vmor %vm317, %vm318
    %v320 = vsel %vm319, %v311, %v316
    %v321 = vrsqrt.pop %v290
    %v322 = vmul.f32 %v321, %v290
    %v323 = vmul.f32 %v322, %v321
    %v324 = vmul.f32 0.5, %v323
    %v325 = vsub.f32 1.5, %v324
    %v326 = vmul.f32 %v321, %v325
    %vm327 = vweird.f32 %v290
    %vm328 = vweird.f32 %v321
    %vm329 = vmor %vm327, %vm328
    %v330 = vsel %vm329, %v321, %v326
    %v331 = vsub.f32 %v238, %v267
    %v332 = vsub.f32 %v240, %v268
    %v333 = vsub.f32 %v243, %v269
    %v334 = vsub.f32 %v245, %v270
    %v335 = vmul.f32 %v331, %v300
    %v336 = vmul.f32 %v332, %v310
    %v337 = vmul.f32 %v333, %v320
    %v338 = vmul.f32 %v334, %v330
    %v339 = vld [vmem:[%s3] sm:$0x1]
    %v341 = vperm.slane %v339, 0
    %v343 = vmul.f32 %v335, %v341
    %v344 = vmul.f32 %v336, %v341
    %v345 = vmul.f32 %v337, %v341
    %v346 = vmul.f32 %v338, %v341
    %v347 = vld [vmem:[%s4] sm:$0x1]
    %v349 = vperm.slane %v347, 0
    %v351 = vadd.f32 %v343, %v349
    %v352 = vadd.f32 %v344, %v349
    %v353 = vadd.f32 %v345, %v349
    %v354 = vadd.f32 %v346, %v349
    %v355 = vpack.c.bf16 %v351, %v351
    %v356 = vpack.c.bf16 %v352, %v352
    %v357 = vpack.c.bf16 %v353, %v353
    %v358 = vpack.c.bf16 %v354, %v354
    %359 = vst [vmem:[#allocation7] sm:$0xf] %v355
    %360 = vst [vmem:[#allocation7 + $0x4] sm:$0xf] %v356
    %361 = vst [vmem:[#allocation7 + $0x8] sm:$0xf] %v357
    %362 = vst [vmem:[#allocation7 + $0xc] sm:$0xf] %v358
    // Predicated region
    $region30: #{tpu_custom_call.1} parent=1 // pred_check
      _
    $region31: #{tpu_custom_call.1} parent=1 // pred_check_branch
      %364 = sbr.rel (0) target = $region33
    $region32: #{tpu_custom_call.1} parent=1 // pred_region
      %366 = vsyncadd [#allocation4], 0
      %s367 = sshll.u32 [#allocation7], 4
      %s368 = int_to_ptr.vmem [resolvable:$true] %s367
      %s369 = sshll.u32 %s5, 4
      %s370 = int_to_ptr.hbm [resolvable:$true] %s369
      %375 = dma.vmem_to_hbm [thread:$0]  %s368, 256, %s370, [#allocation4], 64, 64, 4
    $region33: #{tpu_custom_call.1} parent=1 // pred_fallthru
      _
    // Predicated region
    $region34: #{tpu_custom_call.1} parent=1 // pred_check
      _
    $region35: #{tpu_custom_call.1} parent=1 // pred_check_branch
      %377 = sbr.rel (0) target = $region37
    $region36: #{tpu_custom_call.1} parent=1 // pred_region
      %379 = dma.done [#allocation4], 256
    $region37: #{tpu_custom_call.1} parent=1 // pred_fallthru
      _
    %380 = vsyncpa [#allocation3], 1
    %381 = vsyncpa [#allocation6], 1
    %382 = vsyncpa [#allocation4], 1

// kernel: tpu_custom_call.1
$region0: #{tpu_custom_call.1}
  #allocation0 [shape = 'u32[]', space=smem, size = 0x4, offset = 0x4, fixed_abs, tag = 'smem constant byte address 0x4 - core index']
  #allocation1 [shape = 'u32[72,128]{1,0:T(1,128)}', space=vmem, size = 0x9000, scoped, tag = 'internal scratch']
  %s0 = inlined_call_operand.hbm [shape: bf16[32,256], index: 0, kind: input, shape index: {}]
  %s1 = inlined_call_operand.hbm [shape: bf16[256,128], index: 1, kind: input, shape index: {}]
  %s2 = inlined_call_operand.vmem [shape: f32[1,128], index: 2, kind: input, shape index: {}]
  %s3 = inlined_call_operand.vmem [shape: f32[1,128], index: 3, kind: input, shape index: {}]
  %s4 = inlined_call_operand.vmem [shape: f32[1,128], index: 4, kind: input, shape index: {}]
  %s5 = inlined_call_operand.hbm [shape: bf16[32,128], index: 5, kind: output, shape index: {}]
  %s6 = sld [smem:[#allocation0]]
  $region38: #{tpu_custom_call.1} parent=0
    _
  %s8 = ssub.s32 1, %s6
  %s9 = scalar_select 0, %s8, %s6
  $region1: #{tpu_custom_call.1} parent=0
    #allocation2 [shape = 'u8[16384]{0}', space=vmem, size = 0x4000, scoped, tag = 'input window, operand 0, single buffered']
    #allocation3 [shape = 's32[1]{0}', space=sflag, size = 0x4, scoped, tag = 'scoped memory for tpu_custom_call.1']
    #allocation4 [shape = 's32[1]{0}', space=sflag, size = 0x4, scoped, tag = 'scoped memory for tpu_custom_call.1']
    #allocation5 [shape = 'u8[65536]{0}', space=vmem, size = 0x10000, scoped, tag = 'input window, operand 1, single buffered']
    #allocation6 [shape = 's32[1]{0}', space=sflag, size = 0x4, scoped, tag = 'scoped memory for tpu_custom_call.1']
    #allocation7 [shape = 'u8[8192]{0}', space=vmem, size = 0x2000, scoped, tag = 'output window, operand 0, single buffered']
    %10 = vsyncpa [#allocation3], 0
    %11 = vsyncpa [#allocation6], 0
    %12 = vsyncpa [#allocation4], 0
    // Predicated region
    $region2: #{tpu_custom_call.1} parent=1 // pred_check
      _
    $region3: #{tpu_custom_call.1} parent=1 // pred_check_branch
      %14 = sbr.rel (0) target = $region5
    $region4: #{tpu_custom_call.1} parent=1 // pred_region
      %16 = vsyncadd [#allocation3], 0
      %s17 = sshll.u32 %s0, 4
      %s18 = int_to_ptr.hbm [resolvable:$true] %s17
      %s19 = sshll.u32 [#allocation2], 4
      %s20 = int_to_ptr.vmem [resolvable:$true] %s19
      %25 = dma.hbm_to_vmem [thread:$0]  %s18, 512, %s20, [#allocation3], 128, 128, 8
    $region5: #{tpu_custom_call.1} parent=1 // pred_fallthru
      _
    // Predicated region
    $region6: #{tpu_custom_call.1} parent=1 // pred_check
      _
    $region7: #{tpu_custom_call.1} parent=1 // pred_check_branch
      %27 = sbr.rel (0) target = $region9
    $region8: #{tpu_custom_call.1} parent=1 // pred_region
      %29 = vsyncadd [#allocation6], 0
      %s30 = sshll.u32 %s1, 4
      %s31 = int_to_ptr.hbm [resolvable:$true] %s30
      %s32 = sshll.u32 [#allocation5], 4
      %s33 = int_to_ptr.vmem [resolvable:$true] %s32
      %38 = dma.hbm_to_vmem [thread:$0]  %s31, 2048, %s33, [#allocation6], 64, 64, 4
    $region9: #{tpu_custom_call.1} parent=1 // pred_fallthru
      _
    // Predicated region
    $region10: #{tpu_custom_call.1} parent=1 // pred_check
      _
    $region11: #{tpu_custom_call.1} parent=1 // pred_check_branch
      %40 = sbr.rel (0) target = $region13
    $region12: #{tpu_custom_call.1} parent=1 // pred_region
      _
    $region13: #{tpu_custom_call.1} parent=1 // pred_fallthru
      _
    // Predicated region
    $region14: #{tpu_custom_call.1} parent=1 // pred_check
      _
    $region15: #{tpu_custom_call.1} parent=1 // pred_check_branch
      %42 = sbr.rel (0) target = $region17
    $region16: #{tpu_custom_call.1} parent=1 // pred_region
      _
    $region17: #{tpu_custom_call.1} parent=1 // pred_fallthru
      _
    // Predicated region
    $region18: #{tpu_custom_call.1} parent=1 // pred_check
      _
    $region19: #{tpu_custom_call.1} parent=1 // pred_check_branch
      %44 = sbr.rel (0) target = $region21
    $region20: #{tpu_custom_call.1} parent=1 // pred_region
      _
    $region21: #{tpu_custom_call.1} parent=1 // pred_fallthru
      _
    // Predicated region
    $region22: #{tpu_custom_call.1} parent=1 // pred_check
      _
    $region23: #{tpu_custom_call.1} parent=1 // pred_check_branch
      %46 = sbr.rel (0) target = $region25
    $region24: #{tpu_custom_call.1} parent=1 // pred_region
      %48 = dma.done [#allocation3], 512
    $region25: #{tpu_custom_call.1} parent=1 // pred_fallthru
      _
    // Predicated region
    $region26: #{tpu_custom_call.1} parent=1 // pred_check
      _
    $region27: #{tpu_custom_call.1} parent=1 // pred_check_branch
      %50 = sbr.rel (0) target = $region29
    $region28: #{tpu_custom_call.1} parent=1 // pred_region
      %52 = dma.done [#allocation6], 2048
    $region29: #{tpu_custom_call.1} parent=1 // pred_fallthru
      _
    %v53 = vld [vmem:[#allocation2] sm:$0xff]
    %v54 = vld [vmem:[#allocation2 + $0x8] sm:$0xff]
    %v55 = vld [vmem:[#allocation2 + $0x10] sm:$0xff]
    %v56 = vld [vmem:[#allocation2 + $0x18] sm:$0xff]
    %v57 = vld [vmem:[#allocation5] sm:$0xf]
    %v58 = vld [vmem:[#allocation5 + $0x4] sm:$0xf]
    %v59 = vld [vmem:[#allocation5 + $0x8] sm:$0xf]
    %v60 = vld [vmem:[#allocation5 + $0xc] sm:$0xf]
    %v61 = vld [vmem:[#allocation5 + $0x10] sm:$0xf]
    %v62 = vld [vmem:[#allocation5 + $0x14] sm:$0xf]
    %v63 = vld [vmem:[#allocation5 + $0x18] sm:$0xf]
    %v64 = vld [vmem:[#allocation5 + $0x1c] sm:$0xf]
    %v65 = vld [vmem:[#allocation5 + $0x20] sm:$0xf]
    %v66 = vld [vmem:[#allocation5 + $0x24] sm:$0xf]
    %v67 = vld [vmem:[#allocation5 + $0x28] sm:$0xf]
    %v68 = vld [vmem:[#allocation5 + $0x2c] sm:$0xf]
    %v69 = vld [vmem:[#allocation5 + $0x30] sm:$0xf]
    %v70 = vld [vmem:[#allocation5 + $0x34] sm:$0xf]
    %v71 = vld [vmem:[#allocation5 + $0x38] sm:$0xf]
    %v72 = vld [vmem:[#allocation5 + $0x3c] sm:$0xf]
    %v73 = vld [vmem:[#allocation5 + $0x40] sm:$0xf]
    %v74 = vld [vmem:[#allocation5 + $0x44] sm:$0xf]
    %v75 = vld [vmem:[#allocation5 + $0x48] sm:$0xf]
    %v76 = vld [vmem:[#allocation5 + $0x4c] sm:$0xf]
    %v77 = vld [vmem:[#allocation5 + $0x50] sm:$0xf]
    %v78 = vld [vmem:[#allocation5 + $0x54] sm:$0xf]
    %v79 = vld [vmem:[#allocation5 + $0x58] sm:$0xf]
    %v80 = vld [vmem:[#allocation5 + $0x5c] sm:$0xf]
    %v81 = vld [vmem:[#allocation5 + $0x60] sm:$0xf]
    %v82 = vld [vmem:[#allocation5 + $0x64] sm:$0xf]
    %v83 = vld [vmem:[#allocation5 + $0x68] sm:$0xf]
    %v84 = vld [vmem:[#allocation5 + $0x6c] sm:$0xf]
    %v85 = vld [vmem:[#allocation5 + $0x70] sm:$0xf]
    %v86 = vld [vmem:[#allocation5 + $0x74] sm:$0xf]
    %v87 = vld [vmem:[#allocation5 + $0x78] sm:$0xf]
    %v88 = vld [vmem:[#allocation5 + $0x7c] sm:$0xf]
    %v89 = vld [vmem:[%s2] sm:$0x1]
    %v91 = vperm.slane %v89, 0
    %v97 = vunpack.c.l.b16 %v53
    %v98 = vunpack.c.h.b16 %v53
    %v99 = vunpack.c.l.b16 %v54
    %v100 = vunpack.c.h.b16 %v54
    %v101 = vunpack.c.l.b16 %v55
    %v102 = vunpack.c.h.b16 %v55
    %v103 = vunpack.c.l.b16 %v56
    %v104 = vunpack.c.h.b16 %v56
    %v105 = vpack.c.b16 %v99, %v97
    %v106 = vpack.c.b16 %v100, %v98
    %v107 = vpack.c.b16 %v103, %v101
    %v108 = vpack.c.b16 %v104, %v102
    %v145 = vunpack.c.l.b16 %v57
    %v146 = vunpack.c.l.b16 %v58
    %v147 = vunpack.c.l.b16 %v59
    %v148 = vunpack.c.l.b16 %v60
    %v149 = vunpack.c.l.b16 %v61
    %v150 = vunpack.c.l.b16 %v62
    %v151 = vunpack.c.l.b16 %v63
    %v152 = vunpack.c.l.b16 %v64
    %v153 = vunpack.c.l.b16 %v65
    %v154 = vunpack.c.l.b16 %v66
    %v155 = vunpack.c.l.b16 %v67
    %v156 = vunpack.c.l.b16 %v68
    %v157 = vunpack.c.l.b16 %v69
    %v158 = vunpack.c.l.b16 %v70
    %v159 = vunpack.c.l.b16 %v71
    %v160 = vunpack.c.l.b16 %v72
    %v161 = vunpack.c.l.b16 %v73
    %v162 = vunpack.c.l.b16 %v74
    %v163 = vunpack.c.l.b16 %v75
    %v164 = vunpack.c.l.b16 %v76
    %v165 = vunpack.c.l.b16 %v77
    %v166 = vunpack.c.l.b16 %v78
    %v167 = vunpack.c.l.b16 %v79
    %v168 = vunpack.c.l.b16 %v80
    %v169 = vunpack.c.l.b16 %v81
    %v170 = vunpack.c.l.b16 %v82
    %v171 = vunpack.c.l.b16 %v83
    %v172 = vunpack.c.l.b16 %v84
    %v173 = vunpack.c.l.b16 %v85
    %v174 = vunpack.c.l.b16 %v86
    %v175 = vunpack.c.l.b16 %v87
    %v176 = vunpack.c.l.b16 %v88
    %v177 = vpack.c.b16 %v146, %v145
    %v178 = vpack.c.b16 %v148, %v147
    %v179 = vpack.c.b16 %v150, %v149
    %v180 = vpack.c.b16 %v152, %v151
    %v181 = vpack.c.b16 %v154, %v153
    %v182 = vpack.c.b16 %v156, %v155
    %v183 = vpack.c.b16 %v158, %v157
    %v184 = vpack.c.b16 %v160, %v159
    %v185 = vpack.c.b16 %v162, %v161
    %v186 = vpack.c.b16 %v164, %v163
    %v187 = vpack.c.b16 %v166, %v165
    %v188 = vpack.c.b16 %v168, %v167
    %v189 = vpack.c.b16 %v170, %v169
    %v190 = vpack.c.b16 %v172, %v171
    %v191 = vpack.c.b16 %v174, %v173
    %v192 = vpack.c.b16 %v176, %v175
    %209 = vmatpush.bf16.msra.mxu0 %v184
    %210 = vmatpush.bf16.msra.mxu0 %v183
    %211 = vmatpush.bf16.msra.mxu0 %v182
    %212 = vmatpush.bf16.msra.mxu0 %v181
    %213 = vmatpush.bf16.msra.mxu0 %v180
    %214 = vmatpush.bf16.msra.mxu0 %v179
    %215 = vmatpush.bf16.msra.mxu0 %v178
    %216 = vmatpush.bf16.msra.mxu0 %v177
    %217 = vmatmul.bf16.gmra.mxu0 %v105
    %v218 = vpop.f32.mrf.mxu0
    %v219 = vadd.f32 %v91, %v218
    %v220 = vpop.f32.mrf.mxu0
    %v221 = vadd.f32 %v91, %v220
    %222 = vmatmul.bf16.gmra.mxu0 %v107
    %v223 = vpop.f32.mrf.mxu0
    %v224 = vadd.f32 %v91, %v223
    %v225 = vpop.f32.mrf.mxu0
    %v226 = vadd.f32 %v91, %v225
    %227 = vdwg.mxu0
    %228 = vmatpush.bf16.msra.mxu0 %v192
    %229 = vmatpush.bf16.msra.mxu0 %v191
    %230 = vmatpush.bf16.msra.mxu0 %v190
    %231 = vmatpush.bf16.msra.mxu0 %v189
    %232 = vmatpush.bf16.msra.mxu0 %v188
    %233 = vmatpush.bf16.msra.mxu0 %v187
    %234 = vmatpush.bf16.msra.mxu0 %v186
    %235 = vmatpush.bf16.msra.mxu0 %v185
    %236 = vmatmul.bf16.gmra.mxu0 %v106
    %v237 = vpop.f32.mrf.mxu0
    %v238 = vadd.f32 %v219, %v237
    %v239 = vpop.f32.mrf.mxu0
    %v240 = vadd.f32 %v221, %v239
    %241 = vmatmul.bf16.gmra.mxu0 %v108
    %v242 = vpop.f32.mrf.mxu0
    %v243 = vadd.f32 %v224, %v242
    %v244 = vpop.f32.mrf.mxu0
    %v245 = vadd.f32 %v226, %v244
    %246 = vdwg.mxu0
    %247 = vadd.xlane.f32.xlu0 %v238
    %v248 = vpop.xlane.xlu0 %247
    %249 = vadd.xlane.f32.xlu0 %v240
    %v250 = vpop.xlane.xlu0 %249
    %251 = vadd.xlane.f32.xlu0 %v243
    %v252 = vpop.xlane.xlu0 %251
    %253 = vadd.xlane.f32.xlu0 %v245
    %v254 = vpop.xlane.xlu0 %253
    %v255 = vmul.f32 %v238, %v238
    %v256 = vmul.f32 %v240, %v240
    %v257 = vmul.f32 %v243, %v243
    %v258 = vmul.f32 %v245, %v245
    %259 = vadd.xlane.f32.xlu0 %v255
    %v260 = vpop.xlane.xlu0 %259
    %261 = vadd.xlane.f32.xlu0 %v256
    %v262 = vpop.xlane.xlu0 %261
    %263 = vadd.xlane.f32.xlu0 %v257
    %v264 = vpop.xlane.xlu0 %263
    %265 = vadd.xlane.f32.xlu0 %v258
    %v266 = vpop.xlane.xlu0 %265
    %v267 = vmul.f32 %v248, 0.0078125
    %v268 = vmul.f32 %v250, 0.0078125
    %v269 = vmul.f32 %v252, 0.0078125
    %v270 = vmul.f32 %v254, 0.0078125
    %v271 = vmul.f32 %v260, 0.0078125
    %v272 = vmul.f32 %v262, 0.0078125
    %v273 = vmul.f32 %v264, 0.0078125
    %v274 = vmul.f32 %v266, 0.0078125
    %v275 = vmul.f32 %v267, %v267
    %v276 = vmul.f32 %v268, %v268
    %v277 = vmul.f32 %v269, %v269
    %v278 = vmul.f32 %v270, %v270
    %v279 = vsub.f32 %v271, %v275
    %v280 = vsub.f32 %v272, %v276
    %v281 = vsub.f32 %v273, %v277
    %v282 = vsub.f32 %v274, %v278
    %v283 = vmax.f32 %v279, 0.0
    %v284 = vmax.f32 %v280, 0.0
    %v285 = vmax.f32 %v281, 0.0
    %v286 = vmax.f32 %v282, 0.0
    %v287 = vadd.f32 %v283, 1e-05
    %v288 = vadd.f32 %v284, 1e-05
    %v289 = vadd.f32 %v285, 1e-05
    %v290 = vadd.f32 %v286, 1e-05
    %v291 = vrsqrt.pop %v287
    %v292 = vmul.f32 %v291, %v287
    %v293 = vmul.f32 %v292, %v291
    %v294 = vmul.f32 0.5, %v293
    %v295 = vsub.f32 1.5, %v294
    %v296 = vmul.f32 %v291, %v295
    %vm297 = vweird.f32 %v287
    %vm298 = vweird.f32 %v291
    %vm299 = vmor %vm297, %vm298
    %v300 = vsel %vm299, %v291, %v296
    %v301 = vrsqrt.pop %v288
    %v302 = vmul.f32 %v301, %v288
    %v303 = vmul.f32 %v302, %v301
    %v304 = vmul.f32 0.5, %v303
    %v305 = vsub.f32 1.5, %v304
    %v306 = vmul.f32 %v301, %v305
    %vm307 = vweird.f32 %v288
    %vm308 = vweird.f32 %v301
    %vm309 = vmor %vm307, %vm308
    %v310 = vsel %vm309, %v301, %v306
    %v311 = vrsqrt.pop %v289
    %v312 = vmul.f32 %v311, %v289
    %v313 = vmul.f32 %v312, %v311
    %v314 = vmul.f32 0.5, %v313
    %v315 = vsub.f32 1.5, %v314
    %v316 = vmul.f32 %v311, %v315
    %vm317 = vweird.f32 %v289
    %vm318 = vweird.f32 %v311
    %vm319 = vmor %vm317, %vm318
    %v320 = vsel %vm319, %v311, %v316
    %v321 = vrsqrt.pop %v290
    %v322 = vmul.f32 %v321, %v290
    %v323 = vmul.f32 %v322, %v321
    %v324 = vmul.f32 0.5, %v323
    %v325 = vsub.f32 1.5, %v324
    %v326 = vmul.f32 %v321, %v325
    %vm327 = vweird.f32 %v290
    %vm328 = vweird.f32 %v321
    %vm329 = vmor %vm327, %vm328
    %v330 = vsel %vm329, %v321, %v326
    %v331 = vsub.f32 %v238, %v267
    %v332 = vsub.f32 %v240, %v268
    %v333 = vsub.f32 %v243, %v269
    %v334 = vsub.f32 %v245, %v270
    %v335 = vmul.f32 %v331, %v300
    %v336 = vmul.f32 %v332, %v310
    %v337 = vmul.f32 %v333, %v320
    %v338 = vmul.f32 %v334, %v330
    %v339 = vld [vmem:[%s3] sm:$0x1]
    %v341 = vperm.slane %v339, 0
    %v343 = vmul.f32 %v335, %v341
    %v344 = vmul.f32 %v336, %v341
    %v345 = vmul.f32 %v337, %v341
    %v346 = vmul.f32 %v338, %v341
    %v347 = vld [vmem:[%s4] sm:$0x1]
    %v349 = vperm.slane %v347, 0
    %v351 = vadd.f32 %v343, %v349
    %v352 = vadd.f32 %v344, %v349
    %v353 = vadd.f32 %v345, %v349
    %v354 = vadd.f32 %v346, %v349
    %v355 = vpack.c.bf16 %v351, %v351
    %v356 = vpack.c.bf16 %v352, %v352
    %v357 = vpack.c.bf16 %v353, %v353
    %v358 = vpack.c.bf16 %v354, %v354
    %359 = vst [vmem:[#allocation7] sm:$0xf] %v355
    %360 = vst [vmem:[#allocation7 + $0x4] sm:$0xf] %v356
    %361 = vst [vmem:[#allocation7 + $0x8] sm:$0xf] %v357
    %362 = vst [vmem:[#allocation7 + $0xc] sm:$0xf] %v358
    // Predicated region
    $region30: #{tpu_custom_call.1} parent=1 // pred_check
      _
    $region31: #{tpu_custom_call.1} parent=1 // pred_check_branch
      %364 = sbr.rel (0) target = $region33
    $region32: #{tpu_custom_call.1} parent=1 // pred_region
      %366 = vsyncadd [#allocation4], 0
      %s367 = sshll.u32 [#allocation7], 4
      %s368 = int_to_ptr.vmem [resolvable:$true] %s367
      %s369 = sshll.u32 %s5, 4
      %s370 = int_to_ptr.hbm [resolvable:$true] %s369
      %375 = dma.vmem_to_hbm [thread:$0]  %s368, 256, %s370, [#allocation4], 64, 64, 4
    $region33: #{tpu_custom_call.1} parent=1 // pred_fallthru
      _
    // Predicated region
    $region34: #{tpu_custom_call.1} parent=1 // pred_check
      _
    $region35: #{tpu_custom_call.1} parent=1 // pred_check_branch
      %377 = sbr.rel (0) target = $region37
    $region36: #{tpu_custom_call.1} parent=1 // pred_region
      %379 = dma.done [#allocation4], 256
    $region37: #{tpu_custom_call.1} parent=1 // pred_fallthru
      _
    %380 = vsyncpa [#allocation3], 1
    %381 = vsyncpa [#allocation6], 1
    %382 = vsyncpa [#allocation4], 1

</llo_original>
